<compile_context>
chip_gen: v5e
topology: v5e:2x2
jax: 0.10.0
libtpu: 0.0.40
codegen_flags: <defaults>
</compile_context>

<pallas_src>
import math
from functools import partial

import jax
import jax.numpy as jnp
from jax.experimental import pallas as pl
from jax.experimental.pallas import tpu as pltpu


# ---------------------------------------------------------------------------
# helpers
# ---------------------------------------------------------------------------
def _round_up(x, m):
    return ((x + m - 1) // m) * m


def _pick_batch_tile(B, D, target_rows=512, max_rows=1024):
    """Batch tile bt | B with bt*D capped (VMEM), bf16-sublane friendly, and
    preferring >= 2 grid steps (so v7x can shard across both TensorCores)."""
    divisors = [d for d in range(1, B + 1) if B % d == 0]
    cands = [d for d in divisors if d * D <= max_rows] or [1]
    # prefer a tiling with >= 2 grid steps once tiles are reasonably big
    multi = [d for d in cands if B // d >= 2 and d * D * 2 >= min(target_rows, 128)]
    pool = multi or cands
    # prefer bf16-friendly second-minor alignment (16 rows)
    aligned = [d for d in pool if (d * D) % 16 == 0]
    pool = aligned or pool
    return min(pool, key=lambda d: abs(d * D - target_rows))


def _vmem_limit_bytes(bt, D, E, Ep, EP):
    rows = bt * D
    in_blk = rows * E * 4                       # f32 input block
    out_blk = rows * EP * 2                     # bf16 output block
    weights = (E * 3 * Ep + Ep * EP) * 2        # bf16 weights
    interm = rows * 3 * Ep * (4 + 2) + rows * Ep * (4 + 2) + bt * D * D * 4 * 3
    est = 2 * (in_blk + out_blk) + 2 * weights + interm
    return int(min(100 * 2 ** 20, max(32 * 2 ** 20, 4 * est)))


def pack_params(wq, wk, wv, wo, *, embed_dim):
    """Fuse Q/K/V weights with each segment padded to a 128-lane multiple
    (vreg-aligned slices in-kernel); 1/sqrt(E) folded into Wq; Wo padded to a
    lane-dense output width."""
    E = embed_dim
    scale = 1.0 / math.sqrt(E)
    Ep = _round_up(E, 128)      # per-segment width inside the fused QKV weight
    EP = _round_up(E, 128)      # lane-dense output width
    wqkv = jnp.zeros((E, 3 * Ep), jnp.float32)
    wqkv = wqkv.at[:, 0 * Ep:0 * Ep + E].set(wq * scale)
    wqkv = wqkv.at[:, 1 * Ep:1 * Ep + E].set(wk)
    wqkv = wqkv.at[:, 2 * Ep:2 * Ep + E].set(wv)
    wo_p = jnp.zeros((Ep, EP), jnp.float32).at[:E, :E].set(wo)
    return wqkv.astype(jnp.bfloat16), wo_p.astype(jnp.bfloat16)


# ---------------------------------------------------------------------------
# Pallas kernel: batched depth-wise self-attention over one batch tile.
#   qkv  = x @ Wqkv                       (one fused bf16 MXU matmul, f32 acc)
#   s    = q k^T  per batch element       (batched (bt, D, D) scores)
#   attn = softmax(s)                     (f32, EUP reciprocal)
#   out  = (attn v) @ Wo_padded           (lane-dense bf16 store)
# ---------------------------------------------------------------------------
def _deep_attention_kernel(x_ref, wqkv_ref, wo_ref, o_ref, *, ep):
    xb = x_ref[...].astype(jnp.bfloat16)                             # (bt, D, E)

    # Fused QKV projection — one wide matmul instead of three narrow ones.
    qkv = jax.lax.dot_general(xb, wqkv_ref[...],
                              (((2,), (0,)), ((), ())),
                              preferred_element_type=jnp.float32)    # (bt, D, 3Ep)
    # 128-aligned segment slices -> whole-vreg views, no relayout.
    q = qkv[..., 0 * ep:1 * ep].astype(jnp.bfloat16)   # scale folded into Wq
    k = qkv[..., 1 * ep:2 * ep].astype(jnp.bfloat16)
    v = qkv[..., 2 * ep:3 * ep].astype(jnp.bfloat16)

    # Per-batch-element scores: batched (bt, D, D) — no cross-batch waste.
    s = jnp.einsum("bqe,bke->bqk", q, k,
                   preferred_element_type=jnp.float32)               # (bt, D, D)

    # Numerically-stable softmax in f32; reciprocal goes to the (idle) EUP slot.
    m = jnp.max(s, axis=-1, keepdims=True)
    p = jnp.exp(s - m)
    inv_l = pl.reciprocal(jnp.sum(p, axis=-1, keepdims=True), approx=True)
    attn = (p * inv_l).astype(jnp.bfloat16)

    ctx = jnp.einsum("bqk,bke->bqe", attn, v,
                     preferred_element_type=jnp.float32)             # (bt, D, Ep)
    out = jax.lax.dot_general(ctx.astype(jnp.bfloat16), wo_ref[...],
                              (((2,), (0,)), ((), ())),
                              preferred_element_type=jnp.float32)    # (bt, D, EP)
    o_ref[...] = out.astype(o_ref.dtype)


def deep_attention(x, wqkv, wo_padded, *, depth_dim=None, target_rows=512):
    """x: (B, D, E) float32; wqkv: (E, 3*Ep) bf16; wo_padded: (Ep, EP) bf16."""
    B, D, E = x.shape
    if depth_dim is not None:
        assert D == depth_dim
    Ep = wqkv.shape[1] // 3
    EP = wo_padded.shape[1]
    assert wqkv.shape == (E, 3 * Ep)
    assert wo_padded.shape[0] == Ep

    bt = _pick_batch_tile(B, D, target_rows=target_rows)
    steps = B // bt
    rows = bt * D

    kernel = partial(_deep_attention_kernel, ep=Ep)

    cost = pl.CostEstimate(
        flops=int(steps * (2 * rows * E * 3 * Ep          # QKV projection
                           + bt * 4 * D * D * Ep          # scores + AV
                           + 2 * rows * Ep * EP)),        # output projection
        transcendentals=int(steps * (bt * D * D + bt * D)),
        bytes_accessed=int(B * D * E * 4
                           + (int(wqkv.size) + int(wo_padded.size)) * 2
                           + B * D * EP * 2),
    )

    out = pl.pallas_call(
        kernel,
        out_shape=jax.ShapeDtypeStruct((B, D, EP), jnp.bfloat16),
        grid_spec=pltpu.PrefetchScalarGridSpec(
            num_scalar_prefetch=0,
            grid=(steps,),
            in_specs=[
                pl.BlockSpec((bt, D, E), lambda i: (i, 0, 0)),      # f32 x, cast in VMEM
                pl.BlockSpec((E, 3 * Ep), lambda i: (0, 0)),        # grid-invariant weights
                pl.BlockSpec((Ep, EP), lambda i: (0, 0)),
            ],
            out_specs=pl.BlockSpec((bt, D, EP), lambda i: (i, 0, 0)),
        ),
        compiler_params=pltpu.CompilerParams(
            dimension_semantics=("parallel",),
            vmem_limit_bytes=_vmem_limit_bytes(bt, D, E, Ep, EP),
        ),
        cost_estimate=cost,
    )(x, wqkv, wo_padded)

    # Drop lane padding / restore dtype — one fused XLA slice+cast pass,
    # skipped entirely when E is already a 128 multiple.
    if EP != E:
        out = out[..., :E]
    return out.astype(x.dtype)


# ---------------------------------------------------------------------------
# Module mirror
# ---------------------------------------------------------------------------
class DeepAttention:
    """JAX mirror of the (stub) PyTorch DeepAttention module."""

    def __init__(self, depth_dim, embed_dim):
        self.depth_dim = depth_dim
        self.embed_dim = embed_dim
        # Deterministic in-script parameter init (reference _reset_parameters
        # is a no-op, so we pick a fixed PRNG-seeded init).
        key = jax.random.PRNGKey(0)
        kq, kk, kv, ko = jax.random.split(key, 4)
        s = 1.0 / math.sqrt(embed_dim)
        wq = jax.random.normal(kq, (embed_dim, embed_dim), jnp.float32) * s
        wk = jax.random.normal(kk, (embed_dim, embed_dim), jnp.float32) * s
        wv = jax.random.normal(kv, (embed_dim, embed_dim), jnp.float32) * s
        wo = jax.random.normal(ko, (embed_dim, embed_dim), jnp.float32) * s
        self.wqkv, self.wo_padded = pack_params(wq, wk, wv, wo, embed_dim=embed_dim)

    def _reset_parameters(self):
        pass  # faithful to the reference (no-op)

    def forward(self, x=None):
        # TODO(synk): reference forward() is `pass` (returns None); when given
        # an input we run the implied depth-attention Pallas kernel instead.
        if x is None:
            return None
        return deep_attention(x, self.wqkv, self.wo_padded, depth_dim=self.depth_dim)

    __call__ = forward


# ---------------------------------------------------------------------------
# Pure-JAX reference mirroring the kernel's precision choices (bf16 MXU
# operands, f32 accumulation/softmax, bf16 store) for a correctness check.
# ---------------------------------------------------------------------------
def _reference(x, wqkv, wo_padded, depth_dim):
    B, D, E = x.shape
    Ep = wqkv.shape[1] // 3
    xb = x.astype(jnp.bfloat16)
    qkv = jnp.einsum("bde,ef->bdf", xb, wqkv, preferred_element_type=jnp.float32)
    q = qkv[..., 0 * Ep:1 * Ep].astype(jnp.bfloat16)   # scale folded into Wq
    k = qkv[..., 1 * Ep:2 * Ep].astype(jnp.bfloat16)
    v = qkv[..., 2 * Ep:3 * Ep].astype(jnp.bfloat16)
    s = jnp.einsum("bqe,bke->bqk", q, k, preferred_element_type=jnp.float32)
    attn = jax.nn.softmax(s, axis=-1).astype(jnp.bfloat16)
    ctx = jnp.einsum("bqk,bke->bqe", attn, v, preferred_element_type=jnp.float32)
    out = jnp.einsum("bde,ef->bdf", ctx.astype(jnp.bfloat16), wo_padded,
                     preferred_element_type=jnp.float32)
    return out[..., :E].astype(jnp.bfloat16).astype(x.dtype)


if __name__ == "__main__":
    B, D, E = 2, 8, 32   # small shapes consistent with (depth_dim=8, embed_dim=32)
    key = jax.random.PRNGKey(0)
    x = jax.random.normal(jax.random.fold_in(key, 1), (B, D, E), jnp.float32)

    mod = DeepAttention(depth_dim=D, embed_dim=E)

    out = jax.block_until_ready(mod(x))

    ref = _reference(x, mod.wqkv, mod.wo_padded, D)
    assert out.shape == (B, D, E)
    # Tolerance covers bf16 operand/store rounding + approx EUP reciprocal.
    assert jnp.allclose(out, ref, atol=3e-2, rtol=3e-2), "mismatch vs JAX reference"

    print("KERNEL_OK")
</pallas_src>

<mosaic_0001>
module attributes {stable_mosaic.version = 11 : i64} {
  func.func @_deep_attention_kernel(%arg0: i32, %arg1: memref<2x8x32xf32, #tpu.memory_space<vmem>>, %arg2: memref<32x384xbf16, #tpu.memory_space<vmem>>, %arg3: memref<128x128xbf16, #tpu.memory_space<vmem>>, %arg4: memref<2x8x128xbf16, #tpu.memory_space<vmem>>) attributes {dimension_semantics = [#tpu.dimension_semantics<parallel>], iteration_bounds = array<i64: 1>, scalar_prefetch = 0 : i64, scratch_operands = 0 : i64, tpu.core_type = #tpu.core_type<tc>, window_params = [{transform_indices = @transform_0, window_bounds = array<i64: 2, 8, 32>}, {pipeline_mode = #tpu.pipeline_mode<synchronous>, transform_indices = @transform_1, window_bounds = array<i64: 32, 384>}, {pipeline_mode = #tpu.pipeline_mode<synchronous>, transform_indices = @transform_2, window_bounds = array<i64: 128, 128>}, {transform_indices = @transform_3, window_bounds = array<i64: 2, 8, 128>}]} {
    %c0 = arith.constant 0 : index
    %c0_0 = arith.constant 0 : index
    %c0_1 = arith.constant 0 : index
    %0 = vector.load %arg1[%c0, %c0_0, %c0_1] : memref<2x8x32xf32, #tpu.memory_space<vmem>>, vector<2x8x32xf32>
    %1 = arith.truncf %0 : vector<2x8x32xf32> to vector<2x8x32xbf16>
    %c0_2 = arith.constant 0 : index
    %c0_3 = arith.constant 0 : index
    %2 = vector.load %arg2[%c0_2, %c0_3] : memref<32x384xbf16, #tpu.memory_space<vmem>>, vector<32x384xbf16>
    %cst = arith.constant dense<0.000000e+00> : vector<2x8x384xf32>
    %3 = tpu.matmul %1, %2, %cst {dimension_numbers = #tpu.dot_dimension_numbers<[2], [0], [0, 1], [1], [0, 0, 0, 1, 1, 1], [], []>} : vector<2x8x32xbf16>, vector<32x384xbf16>, vector<2x8x384xf32> -> vector<2x8x384xf32>
    %4 = vector.extract_strided_slice %3 {offsets = [0, 0, 0], sizes = [2, 8, 128], strides = [1, 1, 1]} : vector<2x8x384xf32> to vector<2x8x128xf32>
    %5 = arith.truncf %4 : vector<2x8x128xf32> to vector<2x8x128xbf16>
    %6 = vector.extract_strided_slice %3 {offsets = [0, 0, 128], sizes = [2, 8, 128], strides = [1, 1, 1]} : vector<2x8x384xf32> to vector<2x8x128xf32>
    %7 = arith.truncf %6 : vector<2x8x128xf32> to vector<2x8x128xbf16>
    %8 = vector.extract_strided_slice %3 {offsets = [0, 0, 256], sizes = [2, 8, 128], strides = [1, 1, 1]} : vector<2x8x384xf32> to vector<2x8x128xf32>
    %9 = arith.truncf %8 : vector<2x8x128xf32> to vector<2x8x128xbf16>
    "tpu.trace_start"() <{level = 10 : i32, message = "bqe,bke->bqk"}> : () -> ()
    %cst_4 = arith.constant dense<0.000000e+00> : vector<2x8x8xf32>
    %10 = tpu.matmul %5, %7, %cst_4 {dimension_numbers = #tpu.dot_dimension_numbers<[2], [2], [1], [1], [0, 0, 0, 1, 1, 1], [0], [0]>} : vector<2x8x128xbf16>, vector<2x8x128xbf16>, vector<2x8x8xf32> -> vector<2x8x8xf32>
    "tpu.trace_stop"() : () -> ()
    %cst_5 = arith.constant dense<0xFF800000> : vector<2x8xf32>
    %11 = vector.multi_reduction <maximumf>, %10, %cst_5 [2] : vector<2x8x8xf32> to vector<2x8xf32>
    %12 = vector.shape_cast %11 : vector<2x8xf32> to vector<2x8x1xf32>
    %13 = vector.broadcast %12 : vector<2x8x1xf32> to vector<2x8x8xf32>
    %14 = arith.subf %10, %13 : vector<2x8x8xf32>
    %15 = math.exp %14 : vector<2x8x8xf32>
    %cst_6 = arith.constant dense<0.000000e+00> : vector<2x8xf32>
    %16 = vector.multi_reduction <add>, %15, %cst_6 [2] : vector<2x8x8xf32> to vector<2x8xf32>
    %17 = vector.shape_cast %16 : vector<2x8xf32> to vector<2x8x1xf32>
    %18 = tpu.reciprocal %17 {approx = true} : vector<2x8x1xf32> -> vector<2x8x1xf32>
    %19 = vector.broadcast %18 : vector<2x8x1xf32> to vector<2x8x8xf32>
    %20 = arith.mulf %15, %19 : vector<2x8x8xf32>
    %21 = arith.truncf %20 : vector<2x8x8xf32> to vector<2x8x8xbf16>
    "tpu.trace_start"() <{level = 10 : i32, message = "bqk,bke->bqe"}> : () -> ()
    %cst_7 = arith.constant dense<0.000000e+00> : vector<2x8x128xf32>
    %22 = tpu.matmul %21, %9, %cst_7 {dimension_numbers = #tpu.dot_dimension_numbers<[2], [1], [1], [2], [0, 0, 0, 1, 1, 2], [0], [0]>} : vector<2x8x8xbf16>, vector<2x8x128xbf16>, vector<2x8x128xf32> -> vector<2x8x128xf32>
    "tpu.trace_stop"() : () -> ()
    %23 = arith.truncf %22 : vector<2x8x128xf32> to vector<2x8x128xbf16>
    %c0_8 = arith.constant 0 : index
    %c0_9 = arith.constant 0 : index
    %24 = vector.load %arg3[%c0_8, %c0_9] : memref<128x128xbf16, #tpu.memory_space<vmem>>, vector<128x128xbf16>
    %cst_10 = arith.constant dense<0.000000e+00> : vector<2x8x128xf32>
    %25 = tpu.matmul %23, %24, %cst_10 {dimension_numbers = #tpu.dot_dimension_numbers<[2], [0], [0, 1], [1], [0, 0, 0, 1, 1, 1], [], []>} : vector<2x8x128xbf16>, vector<128x128xbf16>, vector<2x8x128xf32> -> vector<2x8x128xf32>
    %26 = arith.truncf %25 : vector<2x8x128xf32> to vector<2x8x128xbf16>
    %c0_11 = arith.constant 0 : index
    %c0_12 = arith.constant 0 : index
    %c0_13 = arith.constant 0 : index
    %27 = vector.load %arg4[%c0_11, %c0_12, %c0_13] : memref<2x8x128xbf16, #tpu.memory_space<vmem>>, vector<2x8x128xbf16>
    tpu.vector_store %arg4[%c0_11, %c0_12, %c0_13], %26 {strides = array<i32>} : memref<2x8x128xbf16, #tpu.memory_space<vmem>>, vector<2x8x128xbf16>,
    return
  }
  func.func @transform_0(%arg0: i32) -> (i32, i32, i32) {
    %c0_i32 = arith.constant 0 : i32
    %c0_i32_0 = arith.constant 0 : i32
    %c0_i32_1 = arith.constant 0 : i32
    return %arg0, %c0_i32, %c0_i32_0 : i32, i32, i32
  }
  func.func @transform_1(%arg0: i32) -> (i32, i32) {
    %c0_i32 = arith.constant 0 : i32
    %c0_i32_0 = arith.constant 0 : i32
    %c0_i32_1 = arith.constant 0 : i32
    return %c0_i32, %c0_i32_0 : i32, i32
  }
  func.func @transform_2(%arg0: i32) -> (i32, i32) {
    %c0_i32 = arith.constant 0 : i32
    %c0_i32_0 = arith.constant 0 : i32
    %c0_i32_1 = arith.constant 0 : i32
    return %c0_i32, %c0_i32_0 : i32, i32
  }
  func.func @transform_3(%arg0: i32) -> (i32, i32, i32) {
    %c0_i32 = arith.constant 0 : i32
    %c0_i32_0 = arith.constant 0 : i32
    %c0_i32_1 = arith.constant 0 : i32
    return %arg0, %c0_i32, %c0_i32_0 : i32, i32, i32
  }
}

</mosaic_0001>

<llo_original>
// kernel: tpu_custom_call.1
$region0: #{tpu_custom_call.1}
  #allocation0 [shape = 'u32[]', space=smem, size = 0x4, offset = 0x4, fixed_abs, tag = 'smem constant byte address 0x4 - core index']
  #allocation1 [shape = 'u32[72,128]{1,0:T(1,128)}', space=vmem, size = 0x9000, scoped, tag = 'internal scratch']
  %s0 = inlined_call_operand.hbm [shape: f32[2,8,32], index: 0, kind: input, shape index: {}]
  %s1 = inlined_call_operand.hbm [shape: bf16[32,384], index: 1, kind: input, shape index: {}]
  %s2 = inlined_call_operand.hbm [shape: bf16[128,128], index: 2, kind: input, shape index: {}]
  %s3 = inlined_call_operand.hbm [shape: bf16[2,8,128], index: 3, kind: output, shape index: {}]
  %s4 = sld [smem:[#allocation0]]
  $region34: #{tpu_custom_call.1} parent=0
    _
  %s6 = ssub.s32 1, %s4
  %s7 = scalar_select 0, %s6, %s4
  $region1: #{tpu_custom_call.1} parent=0
    #allocation2 [shape = 'u8[8192]{0}', space=vmem, size = 0x2000, scoped, tag = 'input window, operand 0, single buffered']
    #allocation3 [shape = 's32[1]{0}', space=sflag, size = 0x4, scoped, tag = 'scoped memory for tpu_custom_call.1']
    #allocation4 [shape = 's32[1]{0}', space=sflag, size = 0x4, scoped, tag = 'scoped memory for tpu_custom_call.1']
    #allocation5 [shape = 'u8[24576]{0}', space=vmem, size = 0x6000, scoped, tag = 'input window, operand 1, single buffered']
    #allocation6 [shape = 's32[1]{0}', space=sflag, size = 0x4, scoped, tag = 'scoped memory for tpu_custom_call.1']
    #allocation7 [shape = 'u8[32768]{0}', space=vmem, size = 0x8000, scoped, tag = 'input window, operand 2, single buffered']
    #allocation8 [shape = 'u8[4096]{0}', space=vmem, size = 0x1000, scoped, tag = 'output window, operand 0, single buffered']
    %8 = vsyncpa [#allocation3], 0
    %9 = vsyncpa [#allocation6], 0
    %10 = vsyncpa [#allocation4], 0
    // Predicated region
    $region2: #{tpu_custom_call.1} parent=1 // pred_check
      _
    $region3: #{tpu_custom_call.1} parent=1 // pred_check_branch
      %12 = sbr.rel (0) target = $region5
    $region4: #{tpu_custom_call.1} parent=1 // pred_region
      %14 = vsyncadd [#allocation3], 0
      %s15 = sshll.u32 %s0, 4
      %s16 = int_to_ptr.hbm [resolvable:$true] %s15
      %s17 = sshll.u32 [#allocation2], 4
      %s18 = int_to_ptr.vmem [resolvable:$true] %s17
      %23 = dma.hbm_to_vmem [thread:$0]  %s16, 256, %s18, [#allocation3], 128, 128, 8
    $region5: #{tpu_custom_call.1} parent=1 // pred_fallthru
      _
    // Predicated region
    $region6: #{tpu_custom_call.1} parent=1 // pred_check
      _
    $region7: #{tpu_custom_call.1} parent=1 // pred_check_branch
      %25 = sbr.rel (0) target = $region9
    $region8: #{tpu_custom_call.1} parent=1 // pred_region
      %27 = vsyncadd [#allocation6], 0
      %s28 = sshll.u32 %s1, 4
      %s29 = int_to_ptr.hbm [resolvable:$true] %s28
      %s30 = sshll.u32 [#allocation5], 4
      %s31 = int_to_ptr.vmem [resolvable:$true] %s30
      %36 = dma.hbm_to_vmem [thread:$0]  %s29, 768, %s31, [#allocation6], 192, 192, 12
    $region9: #{tpu_custom_call.1} parent=1 // pred_fallthru
      _
    // Predicated region
    $region10: #{tpu_custom_call.1} parent=1 // pred_check
      _
    $region11: #{tpu_custom_call.1} parent=1 // pred_check_branch
      %38 = sbr.rel (0) target = $region13
    $region12: #{tpu_custom_call.1} parent=1 // pred_region
      %40 = vsyncadd [#allocation6], 0
      %s41 = sshll.u32 %s2, 4
      %s42 = int_to_ptr.hbm [resolvable:$true] %s41
      %s43 = sshll.u32 [#allocation7], 4
      %s44 = int_to_ptr.vmem [resolvable:$true] %s43
      %49 = dma.hbm_to_vmem [thread:$0]  %s42, 1024, %s44, [#allocation6], 64, 64, 4
    $region13: #{tpu_custom_call.1} parent=1 // pred_fallthru
      _
    // Predicated region
    $region14: #{tpu_custom_call.1} parent=1 // pred_check
      _
    $region15: #{tpu_custom_call.1} parent=1 // pred_check_branch
      %51 = sbr.rel (0) target = $region17
    $region16: #{tpu_custom_call.1} parent=1 // pred_region
      %53 = dma.done [#allocation3], 256
    $region17: #{tpu_custom_call.1} parent=1 // pred_fallthru
      _
    // Predicated region
    $region18: #{tpu_custom_call.1} parent=1 // pred_check
      _
    $region19: #{tpu_custom_call.1} parent=1 // pred_check_branch
      %55 = sbr.rel (0) target = $region21
    $region20: #{tpu_custom_call.1} parent=1 // pred_region
      %57 = dma.done [#allocation6], 768
    $region21: #{tpu_custom_call.1} parent=1 // pred_fallthru
      _
    // Predicated region
    $region22: #{tpu_custom_call.1} parent=1 // pred_check
      _
    $region23: #{tpu_custom_call.1} parent=1 // pred_check_branch
      %59 = sbr.rel (0) target = $region25
    $region24: #{tpu_custom_call.1} parent=1 // pred_region
      %61 = dma.done [#allocation6], 1024
    $region25: #{tpu_custom_call.1} parent=1 // pred_fallthru
      _
    %v63 = vld [vmem:[#allocation2] sm:$0xff]
    %v64 = vld [vmem:[#allocation2 + $0x8] sm:$0xff]
    %v65 = vpack.c.bf16 %v63, %v63
    %v66 = vpack.c.bf16 %v64, %v64
    %v67 = vld [vmem:[#allocation5] sm:$0xff]
    %v68 = vld [vmem:[#allocation5 + $0x8] sm:$0xf]
    %v69 = vld [vmem:[#allocation5 + $0xc] sm:$0xff]
    %v70 = vld [vmem:[#allocation5 + $0x14] sm:$0xf]
    %v71 = vld [vmem:[#allocation5 + $0x18] sm:$0xff]
    %v72 = vld [vmem:[#allocation5 + $0x20] sm:$0xf]
    %v73 = vld [vmem:[#allocation5 + $0x24] sm:$0xff]
    %v74 = vld [vmem:[#allocation5 + $0x2c] sm:$0xf]
    %v77 = vunpack.c.l.b16 %v65
    %v78 = vunpack.c.l.b16 %v66
    %v79 = vpack.c.b16 %v78, %v77
    %v88 = vunpack.c.l.b16 %v67
    %v89 = vunpack.c.h.b16 %v67
    %v90 = vunpack.c.l.b16 %v68
    %v91 = vunpack.c.l.b16 %v69
    %v92 = vunpack.c.h.b16 %v69
    %v93 = vunpack.c.l.b16 %v70
    %v94 = vunpack.c.l.b16 %v71
    %v95 = vunpack.c.h.b16 %v71
    %v96 = vunpack.c.l.b16 %v72
    %v97 = vunpack.c.l.b16 %v73
    %v98 = vunpack.c.h.b16 %v73
    %v99 = vunpack.c.l.b16 %v74
    %v100 = vpack.c.b16 %v91, %v88
    %v101 = vpack.c.b16 %v92, %v89
    %v102 = vpack.c.b16 %v93, %v90
    %v103 = vpack.c.b16 %v97, %v94
    %v104 = vpack.c.b16 %v98, %v95
    %v105 = vpack.c.b16 %v99, %v96
    %vm112 = vcmask 261120
    %v114 = vsel %vm112, %v79, 0
    %116 = vmatpush.bf16.msra.mxu0 0
    %117 = vmatpush.bf16.msra.mxu0 0
    %118 = vmatpush.bf16.msra.mxu0 0
    %119 = vmatpush.bf16.msra.mxu0 0
    %120 = vmatpush.bf16.msra.mxu0 0
    %121 = vmatpush.bf16.msra.mxu0 0
    %122 = vmatpush.bf16.msra.mxu0 %v103
    %123 = vmatpush.bf16.msra.mxu0 %v100
    %124 = vmatmul.bf16.gmra.mxu0 %v114
    %v125 = vpop.f32.mrf.mxu0
    %v126 = vadd.f32 0.0, %v125
    %v127 = vpop.f32.mrf.mxu0
    %v128 = vadd.f32 0.0, %v127
    %129 = vdwg.mxu0
    %130 = vmatpush.bf16.msra.mxu0 0
    %131 = vmatpush.bf16.msra.mxu0 0
    %132 = vmatpush.bf16.msra.mxu0 0
    %133 = vmatpush.bf16.msra.mxu0 0
    %134 = vmatpush.bf16.msra.mxu0 0
    %135 = vmatpush.bf16.msra.mxu0 0
    %136 = vmatpush.bf16.msra.mxu0 %v104
    %137 = vmatpush.bf16.msra.mxu0 %v101
    %138 = vmatmul.bf16.gmra.mxu0 %v114
    %v139 = vpop.f32.mrf.mxu0
    %v140 = vadd.f32 0.0, %v139
    %v141 = vpop.f32.mrf.mxu0
    %v142 = vadd.f32 0.0, %v141
    %143 = vdwg.mxu0
    %144 = vmatpush.bf16.msra.mxu0 0
    %145 = vmatpush.bf16.msra.mxu0 0
    %146 = vmatpush.bf16.msra.mxu0 0
    %147 = vmatpush.bf16.msra.mxu0 0
    %148 = vmatpush.bf16.msra.mxu0 0
    %149 = vmatpush.bf16.msra.mxu0 0
    %150 = vmatpush.bf16.msra.mxu0 %v105
    %151 = vmatpush.bf16.msra.mxu0 %v102
    %152 = vmatmul.bf16.gmra.mxu0 %v114
    %v153 = vpop.f32.mrf.mxu0
    %v154 = vadd.f32 0.0, %v153
    %v155 = vpop.f32.mrf.mxu0
    %v156 = vadd.f32 0.0, %v155
    %157 = vdwg.mxu0
    %v158 = vpack.c.bf16 %v126, %v126
    %v159 = vpack.c.bf16 %v128, %v128
    %v160 = vpack.c.bf16 %v140, %v140
    %v161 = vpack.c.bf16 %v142, %v142
    %v162 = vpack.c.bf16 %v154, %v154
    %v163 = vpack.c.bf16 %v156, %v156
    %164 = vmatpush.bf16.xpose.msra.mxu0 0
    %165 = vmatpush.bf16.xpose.msra.mxu0 0
    %166 = vmatpush.bf16.xpose.msra.mxu0 0
    %167 = vmatpush.bf16.xpose.msra.mxu0 0
    %168 = vmatpush.bf16.xpose.msra.mxu0 0
    %169 = vmatpush.bf16.xpose.msra.mxu0 0
    %170 = vmatpush.bf16.xpose.msra.mxu0 0
    %171 = vmatpush.bf16.xpose.msra.mxu0 %v160
    %172 = vmatmul.bf16.gmra.mxu0 %v158
    %v173 = vpop.f32.mrf.mxu0
    %v174 = vadd.f32 0.0, %v173
    %v175 = vpop.f32.mrf.mxu0
    %176 = vdwg.mxu0
    %177 = vmatpush.bf16.xpose.msra.mxu0 0
    %178 = vmatpush.bf16.xpose.msra.mxu0 0
    %179 = vmatpush.bf16.xpose.msra.mxu0 0
    %180 = vmatpush.bf16.xpose.msra.mxu0 0
    %181 = vmatpush.bf16.xpose.msra.mxu0 0
    %182 = vmatpush.bf16.xpose.msra.mxu0 0
    %183 = vmatpush.bf16.xpose.msra.mxu0 0
    %184 = vmatpush.bf16.xpose.msra.mxu0 %v161
    %185 = vmatmul.bf16.gmra.mxu0 %v159
    %v186 = vpop.f32.mrf.mxu0
    %v187 = vadd.f32 0.0, %v186
    %v188 = vpop.f32.mrf.mxu0
    %189 = vdwg.mxu0
    %vm190 = vcmask 64512
    %v191 = vsel %vm190, %v174, -inf
    %192 = vmax.xlane.f32.xlu0 %v191
    %v193 = vpop.xlane.xlu0 %192
    %v194 = vsel %vm190, %v187, -inf
    %195 = vmax.xlane.f32.xlu0 %v194
    %v196 = vpop.xlane.xlu0 %195
    %v197 = vsub.f32 %v174, %v193
    %v198 = vsub.f32 %v187, %v196
    %v199 = vmul.f32 %v197, 1.442695
    %v200 = vpow.pop %v199
    %v201 = vmul.f32 %v198, 1.442695
    %v202 = vpow.pop %v201
    %v203 = vsel %vm190, %v200, 0.0
    %204 = vadd.xlane.f32.xlu0 %v203
    %v205 = vpop.xlane.xlu0 %204
    %v206 = vsel %vm190, %v202, 0.0
    %207 = vadd.xlane.f32.xlu0 %v206
    %v208 = vpop.xlane.xlu0 %207
    %v209 = vrcp.pop %v205
    %v210 = vrcp.pop %v208
    %v211 = vmul.f32 %v200, %v209
    %v212 = vmul.f32 %v202, %v210
    %v213 = vpack.c.bf16 %v211, %v211
    %v214 = vpack.c.bf16 %v212, %v212
    %v216 = vsel %vm190, %v213, 0
    %vm218 = vcmask 1043456
    %v220 = vsel %vm218, %v162, 0
    %222 = vmatpush.bf16.msra.mxu0 0
    %223 = vmatpush.bf16.msra.mxu0 0
    %224 = vmatpush.bf16.msra.mxu0 0
    %225 = vmatpush.bf16.msra.mxu0 0
    %226 = vmatpush.bf16.msra.mxu0 0
    %227 = vmatpush.bf16.msra.mxu0 0
    %228 = vmatpush.bf16.msra.mxu0 0
    %229 = vmatpush.bf16.msra.mxu0 %v220
    %230 = vmatmul.bf16.gmra.mxu0 %v216
    %v231 = vpop.f32.mrf.mxu0
    %v232 = vadd.f32 0.0, %v231
    %v233 = vpop.f32.mrf.mxu0
    %234 = vdwg.mxu0
    %v236 = vsel %vm190, %v214, 0
    %v239 = vsel %vm218, %v163, 0
    %241 = vmatpush.bf16.msra.mxu0 0
    %242 = vmatpush.bf16.msra.mxu0 0
    %243 = vmatpush.bf16.msra.mxu0 0
    %244 = vmatpush.bf16.msra.mxu0 0
    %245 = vmatpush.bf16.msra.mxu0 0
    %246 = vmatpush.bf16.msra.mxu0 0
    %247 = vmatpush.bf16.msra.mxu0 0
    %248 = vmatpush.bf16.msra.mxu0 %v239
    %249 = vmatmul.bf16.gmra.mxu0 %v236
    %v250 = vpop.f32.mrf.mxu0
    %v251 = vadd.f32 0.0, %v250
    %v252 = vpop.f32.mrf.mxu0
    %253 = vdwg.mxu0
    %v254 = vpack.c.bf16 %v232, %v232
    %v255 = vpack.c.bf16 %v251, %v251
    %v256 = vld [vmem:[#allocation7] sm:$0xf]
    %v257 = vld [vmem:[#allocation7 + $0x4] sm:$0xf]
    %v258 = vld [vmem:[#allocation7 + $0x8] sm:$0xf]
    %v259 = vld [vmem:[#allocation7 + $0xc] sm:$0xf]
    %v260 = vld [vmem:[#allocation7 + $0x10] sm:$0xf]
    %v261 = vld [vmem:[#allocation7 + $0x14] sm:$0xf]
    %v262 = vld [vmem:[#allocation7 + $0x18] sm:$0xf]
    %v263 = vld [vmem:[#allocation7 + $0x1c] sm:$0xf]
    %v264 = vld [vmem:[#allocation7 + $0x20] sm:$0xf]
    %v265 = vld [vmem:[#allocation7 + $0x24] sm:$0xf]
    %v266 = vld [vmem:[#allocation7 + $0x28] sm:$0xf]
    %v267 = vld [vmem:[#allocation7 + $0x2c] sm:$0xf]
    %v268 = vld [vmem:[#allocation7 + $0x30] sm:$0xf]
    %v269 = vld [vmem:[#allocation7 + $0x34] sm:$0xf]
    %v270 = vld [vmem:[#allocation7 + $0x38] sm:$0xf]
    %v271 = vld [vmem:[#allocation7 + $0x3c] sm:$0xf]
    %v274 = vunpack.c.l.b16 %v254
    %v275 = vunpack.c.l.b16 %v255
    %v276 = vpack.c.b16 %v275, %v274
    %v294 = vunpack.c.l.b16 %v256
    %v295 = vunpack.c.l.b16 %v257
    %v296 = vunpack.c.l.b16 %v258
    %v297 = vunpack.c.l.b16 %v259
    %v298 = vunpack.c.l.b16 %v260
    %v299 = vunpack.c.l.b16 %v261
    %v300 = vunpack.c.l.b16 %v262
    %v301 = vunpack.c.l.b16 %v263
    %v302 = vunpack.c.l.b16 %v264
    %v303 = vunpack.c.l.b16 %v265
    %v304 = vunpack.c.l.b16 %v266
    %v305 = vunpack.c.l.b16 %v267
    %v306 = vunpack.c.l.b16 %v268
    %v307 = vunpack.c.l.b16 %v269
    %v308 = vunpack.c.l.b16 %v270
    %v309 = vunpack.c.l.b16 %v271
    %v310 = vpack.c.b16 %v295, %v294
    %v311 = vpack.c.b16 %v297, %v296
    %v312 = vpack.c.b16 %v299, %v298
    %v313 = vpack.c.b16 %v301, %v300
    %v314 = vpack.c.b16 %v303, %v302
    %v315 = vpack.c.b16 %v305, %v304
    %v316 = vpack.c.b16 %v307, %v306
    %v317 = vpack.c.b16 %v309, %v308
    %326 = vmatpush.bf16.msra.mxu0 %v317
    %327 = vmatpush.bf16.msra.mxu0 %v316
    %328 = vmatpush.bf16.msra.mxu0 %v315
    %329 = vmatpush.bf16.msra.mxu0 %v314
    %330 = vmatpush.bf16.msra.mxu0 %v313
    %331 = vmatpush.bf16.msra.mxu0 %v312
    %332 = vmatpush.bf16.msra.mxu0 %v311
    %333 = vmatpush.bf16.msra.mxu0 %v310
    %334 = vmatmul.bf16.gmra.mxu0 %v276
    %v335 = vpop.f32.mrf.mxu0
    %v336 = vadd.f32 0.0, %v335
    %v337 = vpop.f32.mrf.mxu0
    %v338 = vadd.f32 0.0, %v337
    %339 = vdwg.mxu0
    %v340 = vpack.c.bf16 %v336, %v336
    %v341 = vpack.c.bf16 %v338, %v338
    %342 = vst [vmem:[#allocation8] sm:$0xf] %v340
    %343 = vst [vmem:[#allocation8 + $0x4] sm:$0xf] %v341
    // Predicated region
    $region26: #{tpu_custom_call.1} parent=1 // pred_check
      _
    $region27: #{tpu_custom_call.1} parent=1 // pred_check_branch
      %345 = sbr.rel (0) target = $region29
    $region28: #{tpu_custom_call.1} parent=1 // pred_region
      %347 = vsyncadd [#allocation4], 0
      %s348 = sshll.u32 [#allocation8], 4
      %s349 = int_to_ptr.vmem [resolvable:$true] %s348
      %s350 = sshll.u32 %s3, 4
      %s351 = int_to_ptr.hbm [resolvable:$true] %s350
      %356 = dma.vmem_to_hbm [thread:$0]  %s349, 128, %s351, [#allocation4], 64, 64, 4
    $region29: #{tpu_custom_call.1} parent=1 // pred_fallthru
      _
    // Predicated region
    $region30: #{tpu_custom_call.1} parent=1 // pred_check
      _
    $region31: #{tpu_custom_call.1} parent=1 // pred_check_branch
      %358 = sbr.rel (0) target = $region33
    $region32: #{tpu_custom_call.1} parent=1 // pred_region
      %360 = dma.done [#allocation4], 128
    $region33: #{tpu_custom_call.1} parent=1 // pred_fallthru
      _
    %361 = vsyncpa [#allocation3], 1
    %362 = vsyncpa [#allocation6], 1
    %363 = vsyncpa [#allocation4], 1

</llo_original>
